<compile_context>
chip_gen: v6e
topology: v6e:2x2x1
jax: 0.10.0
libtpu: 0.0.40
codegen_flags: <defaults>
</compile_context>

<pallas_src>
import math

import numpy as np

import jax
import jax.numpy as jnp
from jax.experimental import pallas as pl
from jax.experimental.pallas import tpu as pltpu

IMAGENET_MEAN_ADDINVERSE = (0.485, 0.456, 0.406, 0.515, 0.544, 0.594)
IMAGENET_STD_ADDINVERSE = (0.229, 0.224, 0.225, 0.229, 0.224, 0.225)

_LANE = 128  # lane width (last dim of a vreg)


def _round_down(v, m):
    return v // m * m


def _norm_kernel(x_ref, scale_ref, shift_ref, o_ref):
    # Compute in f32 regardless of input dtype; cast on the store.
    x = x_ref[...].astype(jnp.float32)
    o_ref[...] = (x * scale_ref[...] + shift_ref[...]).astype(o_ref.dtype)


def _generation_budget():
    """Per-TPU-generation (block byte budget, vmem_limit_bytes or None)."""
    kind = ""
    try:
        kind = jax.devices()[0].device_kind.lower()
    except Exception:
        pass
    if "v7" in kind:
        # 2 x (in + out) x 6 MiB = 24 MiB of block buffers; raise the scoped
        # limit for headroom (v7x default scoped VMEM is 32 MiB of 64 MiB).
        return 6 * 1024 * 1024, 40 << 20
    if "v6" in kind:
        # 2 x (in + out) x 4 MiB = 16 MiB fits v6e's 32 MiB default.
        return 4 * 1024 * 1024, None
    # v5e (16 MiB default scoped VMEM) and unknown chips: stay conservative.
    return 2 * 1024 * 1024, None


def bcosify_norm(x):
    """x: (N, 6, H, W). Returns (x - mean) / std with AddInverse ImageNet stats."""
    n, c, h, w = x.shape
    assert c == len(IMAGENET_MEAN_ADDINVERSE)
    hw = h * w
    rows = n * c
    itemsize = jnp.dtype(x.dtype).itemsize

    budget, vmem_limit = _generation_budget()

    # Dtype-aware sublane packing: f32 -> 8, bf16 -> 16, int8/fp8 -> 32.
    packed_sublanes = max(8, 32 // itemsize)
    row_align = math.lcm(c, packed_sublanes)

    # Lane tile: full H*W when the budget allows (contiguous full-row DMA
    # runs), otherwise 128-aligned chunks derived from the byte budget.
    max_hwt = budget // (row_align * itemsize)
    if hw <= max_hwt:
        hwt = hw
    else:
        hwt = max(_LANE, _round_down(max_hwt, _LANE))
    # TODO(synk): if H*W < 128 the output tile's last dim is < 128 and stores
    # become masked vst.msk; if such tiny spatial shapes ever matter, pack
    # multiple rows into the lane dim instead.

    # Row tile: multiple of row_align (dense sublanes + channel-aligned tile
    # starts), sized so a block stays within the byte budget.
    rb_target = max(row_align, _round_down(budget // (hwt * itemsize), row_align))
    rb = rows if rows <= rb_target else rb_target

    # Guarantee >= 2 grid steps along a "parallel" axis when the whole tensor
    # fits a single tile, so v7x's two TensorCores both get work.
    if rb >= rows and hwt >= hw and rows >= 2 * row_align:
        rb = _round_down(rows // 2, row_align)

    # Channel pattern correctness depends on every tile starting on a channel
    # boundary: rb must be a multiple of C.
    assert rb % c == 0, f"row tile {rb} must be a multiple of C={c}"

    grid = (pl.cdiv(rows, rb), pl.cdiv(hw, hwt))

    # Precompute the per-row scale/shift pattern once (tiny (rb, 1) arrays,
    # constant block index -> no per-step recompute inside the kernel).
    mean = np.asarray(IMAGENET_MEAN_ADDINVERSE, np.float32)
    std = np.asarray(IMAGENET_STD_ADDINVERSE, np.float32)
    inv_std = 1.0 / std
    scale = jnp.asarray(np.tile(inv_std, rb // c).reshape(rb, 1), jnp.float32)
    shift = jnp.asarray(np.tile(-mean * inv_std, rb // c).reshape(rb, 1), jnp.float32)

    x2d = x.reshape(rows, hw)  # free reshape (row-major layout)

    out2d = pl.pallas_call(
        _norm_kernel,
        out_shape=jax.ShapeDtypeStruct((rows, hw), x.dtype),
        grid=grid,
        in_specs=[
            pl.BlockSpec((rb, hwt), lambda i, j: (i, j)),
            pl.BlockSpec((rb, 1), lambda i, j: (0, 0)),
            pl.BlockSpec((rb, 1), lambda i, j: (0, 0)),
        ],
        out_specs=pl.BlockSpec((rb, hwt), lambda i, j: (i, j)),
        compiler_params=pltpu.CompilerParams(
            dimension_semantics=("parallel", "parallel"),
            vmem_limit_bytes=vmem_limit,
        ),
    )(x2d, scale, shift)

    return out2d.reshape(n, c, h, w)


if __name__ == "__main__":
    key = jax.random.PRNGKey(0)
    # 6 channels = RGB + inverse RGB ("AddInverse"), small spatial size.
    x = jax.random.uniform(key, (2, 6, 16, 16), dtype=jnp.float32)

    out = bcosify_norm(x)
    out = jax.block_until_ready(out)

    # Reference check in plain JAX.
    mean = jnp.asarray(IMAGENET_MEAN_ADDINVERSE, jnp.float32).reshape(1, 6, 1, 1)
    std = jnp.asarray(IMAGENET_STD_ADDINVERSE, jnp.float32).reshape(1, 6, 1, 1)
    ref = (x - mean) / std
    assert jnp.allclose(out, ref, atol=1e-5, rtol=1e-5), "mismatch vs reference"

    print("KERNEL_OK")
</pallas_src>

<mosaic_0001>
module attributes {stable_mosaic.version = 11 : i64} {
  func.func @_norm_kernel(%arg0: i32, %arg1: i32, %arg2: memref<12x256xf32, #tpu.memory_space<vmem>>, %arg3: memref<12x1xf32, #tpu.memory_space<vmem>>, %arg4: memref<12x1xf32, #tpu.memory_space<vmem>>, %arg5: memref<12x256xf32, #tpu.memory_space<vmem>>) attributes {dimension_semantics = [#tpu.dimension_semantics<parallel>, #tpu.dimension_semantics<parallel>], iteration_bounds = array<i64: 1, 1>, scalar_prefetch = 0 : i64, scratch_operands = 0 : i64, tpu.core_type = #tpu.core_type<tc>, window_params = [{transform_indices = @transform_0, window_bounds = array<i64: 12, 256>}, {pipeline_mode = #tpu.pipeline_mode<synchronous>, transform_indices = @transform_1, window_bounds = array<i64: 12, 1>}, {pipeline_mode = #tpu.pipeline_mode<synchronous>, transform_indices = @transform_2, window_bounds = array<i64: 12, 1>}, {transform_indices = @transform_3, window_bounds = array<i64: 12, 256>}]} {
    %c0 = arith.constant 0 : index
    %c0_0 = arith.constant 0 : index
    %0 = vector.load %arg2[%c0, %c0_0] : memref<12x256xf32, #tpu.memory_space<vmem>>, vector<12x256xf32>
    %c0_1 = arith.constant 0 : index
    %c0_2 = arith.constant 0 : index
    %1 = vector.load %arg3[%c0_1, %c0_2] : memref<12x1xf32, #tpu.memory_space<vmem>>, vector<12x1xf32>
    %2 = vector.broadcast %1 : vector<12x1xf32> to vector<12x256xf32>
    %3 = arith.mulf %0, %2 : vector<12x256xf32>
    %c0_3 = arith.constant 0 : index
    %c0_4 = arith.constant 0 : index
    %4 = vector.load %arg4[%c0_3, %c0_4] : memref<12x1xf32, #tpu.memory_space<vmem>>, vector<12x1xf32>
    %5 = vector.broadcast %4 : vector<12x1xf32> to vector<12x256xf32>
    %6 = arith.addf %3, %5 : vector<12x256xf32>
    %c0_5 = arith.constant 0 : index
    %c0_6 = arith.constant 0 : index
    %7 = vector.load %arg5[%c0_5, %c0_6] : memref<12x256xf32, #tpu.memory_space<vmem>>, vector<12x256xf32>
    tpu.vector_store %arg5[%c0_5, %c0_6], %6 {strides = array<i32>} : memref<12x256xf32, #tpu.memory_space<vmem>>, vector<12x256xf32>,
    return
  }
  func.func @transform_0(%arg0: i32, %arg1: i32) -> (i32, i32) {
    %c0_i32 = arith.constant 0 : i32
    return %arg0, %arg1 : i32, i32
  }
  func.func @transform_1(%arg0: i32, %arg1: i32) -> (i32, i32) {
    %c0_i32 = arith.constant 0 : i32
    %c0_i32_0 = arith.constant 0 : i32
    %c0_i32_1 = arith.constant 0 : i32
    return %c0_i32, %c0_i32_0 : i32, i32
  }
  func.func @transform_2(%arg0: i32, %arg1: i32) -> (i32, i32) {
    %c0_i32 = arith.constant 0 : i32
    %c0_i32_0 = arith.constant 0 : i32
    %c0_i32_1 = arith.constant 0 : i32
    return %c0_i32, %c0_i32_0 : i32, i32
  }
  func.func @transform_3(%arg0: i32, %arg1: i32) -> (i32, i32) {
    %c0_i32 = arith.constant 0 : i32
    return %arg0, %arg1 : i32, i32
  }
}

</mosaic_0001>

<llo_original>
// kernel: tpu_custom_call.1
$region0: #{tpu_custom_call.1}
  #allocation0 [shape = 'u32[]', space=smem, size = 0x4, offset = 0x4, fixed_abs, tag = 'smem constant byte address 0x4 - core index']
  #allocation1 [shape = 'u32[144,128]{1,0:T(1,128)}', space=vmem, size = 0x12000, scoped, tag = 'internal scratch']
  %s0 = inlined_call_operand.vmem [shape: f32[12,256], index: 0, kind: input, shape index: {}]
  %s1 = inlined_call_operand.vmem [shape: f32[12,1], index: 1, kind: input, shape index: {}]
  %s2 = inlined_call_operand.vmem [shape: f32[12,1], index: 2, kind: input, shape index: {}]
  %s3 = inlined_call_operand.hbm [shape: f32[12,256], index: 3, kind: output, shape index: {}]
  %s4 = sld [smem:[#allocation0]]
  $region22: #{tpu_custom_call.1} parent=0
    _
  %s6 = ssub.s32 1, %s4
  %s7 = scalar_select 0, %s6, %s4
  $region1: #{tpu_custom_call.1} parent=0
    #allocation2 [shape = 'u8[16384]{0}', space=vmem, size = 0x4000, scoped, tag = 'output window, operand 0, single buffered']
    #allocation3 [shape = 's32[1]{0}', space=sflag, size = 0x4, scoped, tag = 'scoped memory for tpu_custom_call.1']
    %8 = vsyncpa [#allocation3], 0
    // Predicated region
    $region2: #{tpu_custom_call.1} parent=1 // pred_check
      _
    $region3: #{tpu_custom_call.1} parent=1 // pred_check_branch
      %10 = sbr.rel (0) target = $region5
    $region4: #{tpu_custom_call.1} parent=1 // pred_region
      _
    $region5: #{tpu_custom_call.1} parent=1 // pred_fallthru
      _
    // Predicated region
    $region6: #{tpu_custom_call.1} parent=1 // pred_check
      _
    $region7: #{tpu_custom_call.1} parent=1 // pred_check_branch
      %12 = sbr.rel (0) target = $region9
    $region8: #{tpu_custom_call.1} parent=1 // pred_region
      _
    $region9: #{tpu_custom_call.1} parent=1 // pred_fallthru
      _
    // Predicated region
    $region10: #{tpu_custom_call.1} parent=1 // pred_check
      _
    $region11: #{tpu_custom_call.1} parent=1 // pred_check_branch
      %14 = sbr.rel (0) target = $region13
    $region12: #{tpu_custom_call.1} parent=1 // pred_region
      _
    $region13: #{tpu_custom_call.1} parent=1 // pred_fallthru
      _
    %v15 = vld [vmem:[%s0] sm:$0xff]
    %v16 = vld [vmem:[%s0 + $0x8] sm:$0xff]
    %v17 = vld [vmem:[%s0 + $0x10] sm:$0xf]
    %v18 = vld [vmem:[%s0 + $0x18] sm:$0xf]
    %v19 = vld [vmem:[%s1] sm:$0xff]
    %v20 = vld [vmem:[%s1 + $0x8] sm:$0xf]
    %22 = vset.pattern.permute.xlu0 0
    %23 = vperm.xlu0 %22, %v19
    %v24 = vpop.permute.xlu0 %23
    %27 = vset.pattern.permute.xlu0 0
    %28 = vperm.xlu0 %27, %v20
    %v29 = vpop.permute.xlu0 %28
    %v31 = vmul.f32 %v15, %v24
    %v32 = vmul.f32 %v16, %v24
    %v33 = vmul.f32 %v17, %v29
    %v34 = vmul.f32 %v18, %v29
    %v35 = vld [vmem:[%s2] sm:$0xff]
    %v36 = vld [vmem:[%s2 + $0x8] sm:$0xf]
    %38 = vset.pattern.permute.xlu0 0
    %39 = vperm.xlu0 %38, %v35
    %v40 = vpop.permute.xlu0 %39
    %43 = vset.pattern.permute.xlu0 0
    %44 = vperm.xlu0 %43, %v36
    %v45 = vpop.permute.xlu0 %44
    %v47 = vadd.f32 %v31, %v40
    %v48 = vadd.f32 %v32, %v40
    %v49 = vadd.f32 %v33, %v45
    %v50 = vadd.f32 %v34, %v45
    %51 = vst [vmem:[#allocation2] sm:$0xff] %v47
    %52 = vst [vmem:[#allocation2 + $0x8] sm:$0xff] %v48
    %53 = vst [vmem:[#allocation2 + $0x10] sm:$0xf] %v49
    %54 = vst [vmem:[#allocation2 + $0x18] sm:$0xf] %v50
    // Predicated region
    $region14: #{tpu_custom_call.1} parent=1 // pred_check
      _
    $region15: #{tpu_custom_call.1} parent=1 // pred_check_branch
      %56 = sbr.rel (0) target = $region17
    $region16: #{tpu_custom_call.1} parent=1 // pred_region
      %s58 = ssub.s32 512, 512
      %59 = vsyncadd [#allocation3], %s58
      %s60 = sshll.u32 [#allocation2], 4
      %s61 = int_to_ptr.vmem [resolvable:$true] %s60
      %66 = dma.vmem_to_hbm [thread:$0]  %s61, 512, %s3, [#allocation3], 256, 256, 16
    $region17: #{tpu_custom_call.1} parent=1 // pred_fallthru
      _
    // Predicated region
    $region18: #{tpu_custom_call.1} parent=1 // pred_check
      _
    $region19: #{tpu_custom_call.1} parent=1 // pred_check_branch
      %68 = sbr.rel (0) target = $region21
    $region20: #{tpu_custom_call.1} parent=1 // pred_region
      %69 = dma.done [#allocation3], 512
    $region21: #{tpu_custom_call.1} parent=1 // pred_fallthru
      _
    %70 = vsyncpa [#allocation3], 1

</llo_original>
